<compile_context>
chip_gen: v7x
topology: tpu7x:2x2x1
jax: 0.10.0
libtpu: 0.0.40
codegen_flags: <defaults>
</compile_context>

<pallas_src>
import functools

import jax
import jax.numpy as jnp
from jax.experimental import pallas as pl
from jax.experimental.pallas import tpu as pltpu

EPS = 1e-5  # nn.InstanceNorm2d default eps (affine=False, biased variance)


# ------------------------------ Pallas kernel ------------------------------ #

def _resnet_block_kernel(x_ref, w1_ref, w2_ref, o_ref, tap_ref, *, H, W):
    """Fused ResnetBlock forward for one batch element.

    x_ref  : (1, C, H*W)   input sample, spatial flattened onto the lane axis (f32)
    w1_ref : (C, 9*C)      conv1 weight, K index = (kh*3+kw)*C_in + c_in (MXU dtype)
    w2_ref : (C, 9*C)      conv2 weight, same layout
    o_ref  : (1, C, H*W)   x + IN(conv2(pad(relu(IN(conv1(pad(x)))))))
    tap_ref: (9*C, H*W)    VMEM scratch holding the K-stacked reflect-padded taps
    """
    HW = H * W
    x = x_ref[0]                                    # (C, HW) float32
    C = x.shape[0]

    # Boundary masks from a single (1, HW) iota row; jnp.where sublane-broadcasts
    # them, so they cost one 32-bit row instead of four full (C, HW) planes.
    lane = jax.lax.broadcasted_iota(jnp.int32, (1, HW), 1)
    if (W & (W - 1)) == 0:                          # power-of-two W: no integer div
        shift = W.bit_length() - 1
        row = lane >> shift
        col = lane & (W - 1)
    else:
        row = lane // W
        col = lane - row * W
    row_first = row == 0
    row_last = row == H - 1
    col_first = col == 0
    col_last = col == W - 1

    def build_taps(v):
        """Write the 9 reflect-padded 3x3 taps of v (C, HW) into tap_ref, K-stacked.

        Cyclic XLU rotates give the +-W / +-1 neighbours; reflect-pad boundary
        rows/cols are fixed up with selects. Taps are stored immediately so at
        most ~3-4 (C, HW) f32 temporaries are live at any time.
        """
        above = pltpu.roll(v, W, axis=1)             # v[(i-1, j)]  (cyclic)
        below = pltpu.roll(v, HW - W, axis=1)        # v[(i+1, j)]  (cyclic)
        rows = (jnp.where(row_first, below, above),  # kh = 0, reflected at i = 0
                v,                                   # kh = 1
                jnp.where(row_last, above, below))   # kh = 2, reflected at i = H-1
        for kh, r in enumerate(rows):
            left = pltpu.roll(r, 1, axis=1)          # r[(i, j-1)]  (cyclic)
            right = pltpu.roll(r, HW - 1, axis=1)    # r[(i, j+1)]  (cyclic)
            t0 = jnp.where(col_first, right, left)   # kw = 0, reflected at j = 0
            t2 = jnp.where(col_last, left, right)    # kw = 2, reflected at j = W-1
            base = kh * 3 * C
            tap_ref[base:base + C, :] = t0.astype(tap_ref.dtype)
            tap_ref[base + C:base + 2 * C, :] = r.astype(tap_ref.dtype)
            tap_ref[base + 2 * C:base + 3 * C, :] = t2.astype(tap_ref.dtype)

    def conv3x3(v, w_ref):
        # One fat MXU matmul: (C, 9C) @ (9C, HW), f32 accumulation.
        # (No bias: it is an exact no-op before InstanceNorm(affine=False).)
        build_taps(v)
        return jnp.dot(w_ref[...], tap_ref[...],
                       preferred_element_type=jnp.float32)

    def instance_norm(a):
        # Two-pass (centered) variance in f32: same op count here, since the
        # centered values are reused for the normalized output.
        mean = jnp.sum(a, axis=1, keepdims=True) * (1.0 / HW)
        c = a - mean
        var = jnp.sum(c * c, axis=1, keepdims=True) * (1.0 / HW)
        return c * jax.lax.rsqrt(var + EPS)

    y = jnp.maximum(instance_norm(conv3x3(x, w1_ref)), 0.0)   # stage 1 + ReLU
    y = instance_norm(conv3x3(y, w2_ref))                     # stage 2
    o_ref[0] = (x + y).astype(o_ref.dtype)                    # residual add


# -------------------------------- wrapper ----------------------------------- #

def _stacked_weight(w, dtype):
    """(C_out, C_in, 3, 3) -> (C_out, 9*C_in); K index = (kh*3 + kw)*C_in + c_in."""
    c_out, c_in = w.shape[0], w.shape[1]
    return jnp.transpose(w, (0, 2, 3, 1)).reshape(c_out, 9 * c_in).astype(dtype)


def resnet_block_pallas(x, w1, b1, w2, b2, *, mxu_dtype=jnp.bfloat16):
    """x: (B, C, H, W) float32 (NCHW). Returns x + conv_block(x).

    b1/b2 are accepted for interface parity with nn.Conv2d(bias=True) but are
    not used: a per-channel bias right before InstanceNorm(affine=False) is
    removed exactly by the mean subtraction. Do NOT reuse this kernel where an
    activation sits between the conv and the norm.

    mxu_dtype: dtype fed to the MXU dots (weights + stacked taps). bfloat16 by
    default; all elementwise math / masks / InstanceNorm stats stay in f32.
    """
    del b1, b2
    B, C, H, W = x.shape
    HW = H * W

    w1s = _stacked_weight(w1, mxu_dtype)
    w2s = _stacked_weight(w2, mxu_dtype)
    xf = x.reshape(B, C, HW)

    kernel = functools.partial(_resnet_block_kernel, H=H, W=W)

    # Explicit VMEM budget: per-step working set with headroom, capped below
    # v7x's 64 MiB physical VMEM.
    bpe = jnp.dtype(mxu_dtype).itemsize
    est = (4 * C * HW * 4                 # x / out blocks, double-buffered
           + 2 * 2 * C * 9 * C * bpe      # both conv weights, double-buffered
           + 9 * C * HW * bpe             # K-stacked tap scratch
           + 8 * C * HW * 4)              # live f32 temporaries (taps / IN)
    vmem_limit = int(min(max(4 * est, 32 << 20), 48 << 20))

    out = pl.pallas_call(
        kernel,
        out_shape=jax.ShapeDtypeStruct((B, C, HW), x.dtype),
        grid=(B,),
        in_specs=[
            pl.BlockSpec((1, C, HW), lambda b: (b, 0, 0)),
            pl.BlockSpec((C, 9 * C), lambda b: (0, 0)),   # resident in VMEM
            pl.BlockSpec((C, 9 * C), lambda b: (0, 0)),   # resident in VMEM
        ],
        out_specs=pl.BlockSpec((1, C, HW), lambda b: (b, 0, 0)),
        scratch_shapes=[pltpu.VMEM((9 * C, HW), mxu_dtype)],
        compiler_params=pltpu.CompilerParams(
            dimension_semantics=("parallel",),   # batch -> both v7x TCs when B >= 2
            vmem_limit_bytes=vmem_limit),
    )(xf, w1s, w2s)
    # TODO(synk): for large C*H*W (e.g. 128x128x128+) add an HW-tile grid axis
    #   (+-W-row halo, accumulator-based InstanceNorm) so the per-sample block
    #   fits v7x's 64 MiB VMEM; that axis also keeps both v7x cores busy at B==1.
    # TODO(synk): single-buffer the constant weight blocks
    #   (pipeline_mode=pl.Buffered(1)) and fold several samples per grid step
    #   when C*HW is tiny (C=4, 16x16) to amortize the ~0.35us/step overhead.
    return out.reshape(B, C, H, W)


# --------------------------- pure-JAX reference ----------------------------- #

def _reflect_pad(x):
    return jnp.pad(x, ((0, 0), (0, 0), (1, 1), (1, 1)), mode="reflect")


def resnet_block_ref(x, w1, b1, w2, b2):
    def conv(inp, w, b):
        y = jax.lax.conv_general_dilated(
            inp, w, window_strides=(1, 1), padding="VALID",
            dimension_numbers=("NCHW", "OIHW", "NCHW"))
        return y + b[None, :, None, None]

    def inorm(y):
        m = y.mean(axis=(2, 3), keepdims=True)
        v = ((y - m) ** 2).mean(axis=(2, 3), keepdims=True)
        return (y - m) / jnp.sqrt(v + EPS)

    y = jax.nn.relu(inorm(conv(_reflect_pad(x), w1, b1)))
    return x + inorm(conv(_reflect_pad(y), w2, b2))


# ---------------------------------- main ------------------------------------ #

if __name__ == "__main__":
    B, C, H, W = 2, 4, 16, 16  # dim = 4 channels

    key = jax.random.PRNGKey(0)
    kx, kw1, kb1, kw2, kb2 = jax.random.split(key, 5)

    x = jax.random.normal(kx, (B, C, H, W), dtype=jnp.float32)
    # Synthetic conv parameters (shapes match nn.Conv2d(dim, dim, 3, bias=True)).
    w1 = 0.2 * jax.random.normal(kw1, (C, C, 3, 3), dtype=jnp.float32)
    b1 = 0.1 * jax.random.normal(kb1, (C,), dtype=jnp.float32)
    w2 = 0.2 * jax.random.normal(kw2, (C, C, 3, 3), dtype=jnp.float32)
    b2 = 0.1 * jax.random.normal(kb2, (C,), dtype=jnp.float32)

    ref = jax.block_until_ready(resnet_block_ref(x, w1, b1, w2, b2))

    # Exact-math check: f32-fed MXU path must match the reference tightly.
    out_f32 = jax.block_until_ready(
        jax.jit(functools.partial(resnet_block_pallas, mxu_dtype=jnp.float32))(
            x, w1, b1, w2, b2))
    assert out_f32.shape == (B, C, H, W)
    assert jnp.allclose(out_f32, ref, atol=5e-4, rtol=5e-4), \
        f"f32 max abs err = {jnp.max(jnp.abs(out_f32 - ref))}"

    # Default (bf16-fed MXU) path: looser tolerance per bf16 operand precision;
    # InstanceNorm re-normalizes most of the conv rounding error.
    out = jax.block_until_ready(jax.jit(resnet_block_pallas)(x, w1, b1, w2, b2))
    assert out.shape == (B, C, H, W)
    assert jnp.allclose(out, ref, atol=1e-1, rtol=1e-1), \
        f"bf16 max abs err = {jnp.max(jnp.abs(out - ref))}"

    print("KERNEL_OK")
</pallas_src>

<mosaic_0001>
module attributes {stable_mosaic.version = 11 : i64} {
  func.func @_resnet_block_kernel(%arg0: i32, %arg1: memref<1x4x256xf32, #tpu.memory_space<vmem>>, %arg2: memref<4x36xf32, #tpu.memory_space<vmem>>, %arg3: memref<4x36xf32, #tpu.memory_space<vmem>>, %arg4: memref<1x4x256xf32, #tpu.memory_space<vmem>>, %arg5: memref<36x256xf32, #tpu.memory_space<vmem>>) attributes {dimension_semantics = [#tpu.dimension_semantics<parallel>], iteration_bounds = array<i64: 2>, scalar_prefetch = 0 : i64, scratch_operands = 1 : i64, tpu.core_type = #tpu.core_type<tc>, window_params = [{transform_indices = @transform_0, window_bounds = array<i64: 1, 4, 256>}, {pipeline_mode = #tpu.pipeline_mode<synchronous>, transform_indices = @transform_1, window_bounds = array<i64: 4, 36>}, {pipeline_mode = #tpu.pipeline_mode<synchronous>, transform_indices = @transform_2, window_bounds = array<i64: 4, 36>}, {transform_indices = @transform_3, window_bounds = array<i64: 1, 4, 256>}]} {
    %c0 = arith.constant 0 : index
    %c0_0 = arith.constant 0 : index
    %c0_1 = arith.constant 0 : index
    %0 = vector.load %arg1[%c0, %c0_0, %c0_1] : memref<1x4x256xf32, #tpu.memory_space<vmem>>, vector<1x4x256xf32>
    %1 = vector.shape_cast %0 : vector<1x4x256xf32> to vector<4x256xf32>
    %2 = tpu.iota {dimensions = array<i32: 1>} : vector<1x256xi32>
    %c4_i32 = arith.constant 4 : i32
    %3 = vector.broadcast %c4_i32 : i32 to vector<1x256xi32>
    %4 = arith.shrsi %2, %3 : vector<1x256xi32>
    %c15_i32 = arith.constant 15 : i32
    %5 = vector.broadcast %c15_i32 : i32 to vector<1x256xi32>
    %6 = arith.andi %2, %5 : vector<1x256xi32>
    %c0_i32 = arith.constant 0 : i32
    %7 = vector.broadcast %c0_i32 : i32 to vector<1x256xi32>
    %8 = arith.cmpi eq, %4, %7 : vector<1x256xi32>
    %c15_i32_2 = arith.constant 15 : i32
    %9 = vector.broadcast %c15_i32_2 : i32 to vector<1x256xi32>
    %10 = arith.cmpi eq, %4, %9 : vector<1x256xi32>
    %c0_i32_3 = arith.constant 0 : i32
    %11 = vector.broadcast %c0_i32_3 : i32 to vector<1x256xi32>
    %12 = arith.cmpi eq, %6, %11 : vector<1x256xi32>
    %c15_i32_4 = arith.constant 15 : i32
    %13 = vector.broadcast %c15_i32_4 : i32 to vector<1x256xi32>
    %14 = arith.cmpi eq, %6, %13 : vector<1x256xi32>
    %c16_i32 = arith.constant 16 : i32
    %15 = tpu.dynamic_rotate %1 by %c16_i32 dim 1 : vector<4x256xf32>, i32 -> vector<4x256xf32>
    %c240_i32 = arith.constant 240 : i32
    %16 = tpu.dynamic_rotate %1 by %c240_i32 dim 1 : vector<4x256xf32>, i32 -> vector<4x256xf32>
    %17 = vector.shape_cast %8 : vector<1x256xi1> to vector<1x256xi1>
    %18 = vector.broadcast %17 : vector<1x256xi1> to vector<4x256xi1>
    %19 = arith.select %18, %16, %15 : vector<4x256xi1>, vector<4x256xf32>
    %20 = vector.shape_cast %10 : vector<1x256xi1> to vector<1x256xi1>
    %21 = vector.broadcast %20 : vector<1x256xi1> to vector<4x256xi1>
    %22 = arith.select %21, %15, %16 : vector<4x256xi1>, vector<4x256xf32>
    %c1_i32 = arith.constant 1 : i32
    %23 = tpu.dynamic_rotate %19 by %c1_i32 dim 1 : vector<4x256xf32>, i32 -> vector<4x256xf32>
    %c255_i32 = arith.constant 255 : i32
    %24 = tpu.dynamic_rotate %19 by %c255_i32 dim 1 : vector<4x256xf32>, i32 -> vector<4x256xf32>
    %25 = vector.shape_cast %12 : vector<1x256xi1> to vector<1x256xi1>
    %26 = vector.broadcast %25 : vector<1x256xi1> to vector<4x256xi1>
    %27 = arith.select %26, %24, %23 : vector<4x256xi1>, vector<4x256xf32>
    %28 = vector.shape_cast %14 : vector<1x256xi1> to vector<1x256xi1>
    %29 = vector.broadcast %28 : vector<1x256xi1> to vector<4x256xi1>
    %30 = arith.select %29, %23, %24 : vector<4x256xi1>, vector<4x256xf32>
    %c0_5 = arith.constant 0 : index
    %c0_6 = arith.constant 0 : index
    %31 = vector.load %arg5[%c0_5, %c0_6] : memref<36x256xf32, #tpu.memory_space<vmem>>, vector<4x256xf32>
    tpu.vector_store %arg5[%c0_5, %c0_6], %27 {strides = array<i32>} : memref<36x256xf32, #tpu.memory_space<vmem>>, vector<4x256xf32>,
    %c4 = arith.constant 4 : index
    %c0_7 = arith.constant 0 : index
    %32 = vector.load %arg5[%c4, %c0_7] : memref<36x256xf32, #tpu.memory_space<vmem>>, vector<4x256xf32>
    tpu.vector_store %arg5[%c4, %c0_7], %19 {strides = array<i32>} : memref<36x256xf32, #tpu.memory_space<vmem>>, vector<4x256xf32>,
    %c8 = arith.constant 8 : index
    %c0_8 = arith.constant 0 : index
    %33 = vector.load %arg5[%c8, %c0_8] : memref<36x256xf32, #tpu.memory_space<vmem>>, vector<4x256xf32>
    tpu.vector_store %arg5[%c8, %c0_8], %30 {strides = array<i32>} : memref<36x256xf32, #tpu.memory_space<vmem>>, vector<4x256xf32>,
    %c1_i32_9 = arith.constant 1 : i32
    %34 = tpu.dynamic_rotate %1 by %c1_i32_9 dim 1 : vector<4x256xf32>, i32 -> vector<4x256xf32>
    %c255_i32_10 = arith.constant 255 : i32
    %35 = tpu.dynamic_rotate %1 by %c255_i32_10 dim 1 : vector<4x256xf32>, i32 -> vector<4x256xf32>
    %36 = vector.shape_cast %12 : vector<1x256xi1> to vector<1x256xi1>
    %37 = vector.broadcast %36 : vector<1x256xi1> to vector<4x256xi1>
    %38 = arith.select %37, %35, %34 : vector<4x256xi1>, vector<4x256xf32>
    %39 = vector.shape_cast %14 : vector<1x256xi1> to vector<1x256xi1>
    %40 = vector.broadcast %39 : vector<1x256xi1> to vector<4x256xi1>
    %41 = arith.select %40, %34, %35 : vector<4x256xi1>, vector<4x256xf32>
    %c12 = arith.constant 12 : index
    %c0_11 = arith.constant 0 : index
    %42 = vector.load %arg5[%c12, %c0_11] : memref<36x256xf32, #tpu.memory_space<vmem>>, vector<4x256xf32>
    tpu.vector_store %arg5[%c12, %c0_11], %38 {strides = array<i32>} : memref<36x256xf32, #tpu.memory_space<vmem>>, vector<4x256xf32>,
    %c16 = arith.constant 16 : index
    %c0_12 = arith.constant 0 : index
    %43 = vector.load %arg5[%c16, %c0_12] : memref<36x256xf32, #tpu.memory_space<vmem>>, vector<4x256xf32>
    tpu.vector_store %arg5[%c16, %c0_12], %1 {strides = array<i32>} : memref<36x256xf32, #tpu.memory_space<vmem>>, vector<4x256xf32>,
    %c20 = arith.constant 20 : index
    %c0_13 = arith.constant 0 : index
    %44 = vector.load %arg5[%c20, %c0_13] : memref<36x256xf32, #tpu.memory_space<vmem>>, vector<4x256xf32>
    tpu.vector_store %arg5[%c20, %c0_13], %41 {strides = array<i32>} : memref<36x256xf32, #tpu.memory_space<vmem>>, vector<4x256xf32>,
    %c1_i32_14 = arith.constant 1 : i32
    %45 = tpu.dynamic_rotate %22 by %c1_i32_14 dim 1 : vector<4x256xf32>, i32 -> vector<4x256xf32>
    %c255_i32_15 = arith.constant 255 : i32
    %46 = tpu.dynamic_rotate %22 by %c255_i32_15 dim 1 : vector<4x256xf32>, i32 -> vector<4x256xf32>
    %47 = vector.shape_cast %12 : vector<1x256xi1> to vector<1x256xi1>
    %48 = vector.broadcast %47 : vector<1x256xi1> to vector<4x256xi1>
    %49 = arith.select %48, %46, %45 : vector<4x256xi1>, vector<4x256xf32>
    %50 = vector.shape_cast %14 : vector<1x256xi1> to vector<1x256xi1>
    %51 = vector.broadcast %50 : vector<1x256xi1> to vector<4x256xi1>
    %52 = arith.select %51, %45, %46 : vector<4x256xi1>, vector<4x256xf32>
    %c24 = arith.constant 24 : index
    %c0_16 = arith.constant 0 : index
    %53 = vector.load %arg5[%c24, %c0_16] : memref<36x256xf32, #tpu.memory_space<vmem>>, vector<4x256xf32>
    tpu.vector_store %arg5[%c24, %c0_16], %49 {strides = array<i32>} : memref<36x256xf32, #tpu.memory_space<vmem>>, vector<4x256xf32>,
    %c28 = arith.constant 28 : index
    %c0_17 = arith.constant 0 : index
    %54 = vector.load %arg5[%c28, %c0_17] : memref<36x256xf32, #tpu.memory_space<vmem>>, vector<4x256xf32>
    tpu.vector_store %arg5[%c28, %c0_17], %22 {strides = array<i32>} : memref<36x256xf32, #tpu.memory_space<vmem>>, vector<4x256xf32>,
    %c32 = arith.constant 32 : index
    %c0_18 = arith.constant 0 : index
    %55 = vector.load %arg5[%c32, %c0_18] : memref<36x256xf32, #tpu.memory_space<vmem>>, vector<4x256xf32>
    tpu.vector_store %arg5[%c32, %c0_18], %52 {strides = array<i32>} : memref<36x256xf32, #tpu.memory_space<vmem>>, vector<4x256xf32>,
    %c0_19 = arith.constant 0 : index
    %c0_20 = arith.constant 0 : index
    %56 = vector.load %arg2[%c0_19, %c0_20] : memref<4x36xf32, #tpu.memory_space<vmem>>, vector<4x36xf32>
    %c0_21 = arith.constant 0 : index
    %c0_22 = arith.constant 0 : index
    %57 = vector.load %arg5[%c0_21, %c0_22] : memref<36x256xf32, #tpu.memory_space<vmem>>, vector<36x256xf32>
    %cst = arith.constant dense<0.000000e+00> : vector<4x256xf32>
    %58 = tpu.matmul %56, %57, %cst {dimension_numbers = #tpu.dot_dimension_numbers<[1], [0], [0], [1], [0, 0, 1, 1], [], []>} : vector<4x36xf32>, vector<36x256xf32>, vector<4x256xf32> -> vector<4x256xf32>
    %cst_23 = arith.constant dense<0.000000e+00> : vector<4xf32>
    %59 = vector.multi_reduction <add>, %58, %cst_23 [1] : vector<4x256xf32> to vector<4xf32>
    %60 = vector.shape_cast %59 : vector<4xf32> to vector<4x1xf32>
    %cst_24 = arith.constant 3.906250e-03 : f32
    %61 = vector.broadcast %cst_24 : f32 to vector<4x1xf32>
    %62 = arith.mulf %60, %61 : vector<4x1xf32>
    %63 = vector.broadcast %62 : vector<4x1xf32> to vector<4x256xf32>
    %64 = arith.subf %58, %63 : vector<4x256xf32>
    %65 = arith.mulf %64, %64 : vector<4x256xf32>
    %cst_25 = arith.constant dense<0.000000e+00> : vector<4xf32>
    %66 = vector.multi_reduction <add>, %65, %cst_25 [1] : vector<4x256xf32> to vector<4xf32>
    %67 = vector.shape_cast %66 : vector<4xf32> to vector<4x1xf32>
    %cst_26 = arith.constant 3.906250e-03 : f32
    %68 = vector.broadcast %cst_26 : f32 to vector<4x1xf32>
    %69 = arith.mulf %67, %68 : vector<4x1xf32>
    %cst_27 = arith.constant 9.99999974E-6 : f32
    %70 = vector.broadcast %cst_27 : f32 to vector<4x1xf32>
    %71 = arith.addf %69, %70 : vector<4x1xf32>
    %72 = math.rsqrt %71 : vector<4x1xf32>
    %73 = vector.broadcast %72 : vector<4x1xf32> to vector<4x256xf32>
    %74 = arith.mulf %64, %73 : vector<4x256xf32>
    %cst_28 = arith.constant 0.000000e+00 : f32
    %75 = vector.broadcast %cst_28 : f32 to vector<4x256xf32>
    %76 = arith.maximumf %74, %75 : vector<4x256xf32>
    %c16_i32_29 = arith.constant 16 : i32
    %77 = tpu.dynamic_rotate %76 by %c16_i32_29 dim 1 : vector<4x256xf32>, i32 -> vector<4x256xf32>
    %c240_i32_30 = arith.constant 240 : i32
    %78 = tpu.dynamic_rotate %76 by %c240_i32_30 dim 1 : vector<4x256xf32>, i32 -> vector<4x256xf32>
    %79 = vector.shape_cast %8 : vector<1x256xi1> to vector<1x256xi1>
    %80 = vector.broadcast %79 : vector<1x256xi1> to vector<4x256xi1>
    %81 = arith.select %80, %78, %77 : vector<4x256xi1>, vector<4x256xf32>
    %82 = vector.shape_cast %10 : vector<1x256xi1> to vector<1x256xi1>
    %83 = vector.broadcast %82 : vector<1x256xi1> to vector<4x256xi1>
    %84 = arith.select %83, %77, %78 : vector<4x256xi1>, vector<4x256xf32>
    %c1_i32_31 = arith.constant 1 : i32
    %85 = tpu.dynamic_rotate %81 by %c1_i32_31 dim 1 : vector<4x256xf32>, i32 -> vector<4x256xf32>
    %c255_i32_32 = arith.constant 255 : i32
    %86 = tpu.dynamic_rotate %81 by %c255_i32_32 dim 1 : vector<4x256xf32>, i32 -> vector<4x256xf32>
    %87 = vector.shape_cast %12 : vector<1x256xi1> to vector<1x256xi1>
    %88 = vector.broadcast %87 : vector<1x256xi1> to vector<4x256xi1>
    %89 = arith.select %88, %86, %85 : vector<4x256xi1>, vector<4x256xf32>
    %90 = vector.shape_cast %14 : vector<1x256xi1> to vector<1x256xi1>
    %91 = vector.broadcast %90 : vector<1x256xi1> to vector<4x256xi1>
    %92 = arith.select %91, %85, %86 : vector<4x256xi1>, vector<4x256xf32>
    %c0_33 = arith.constant 0 : index
    %c0_34 = arith.constant 0 : index
    %93 = vector.load %arg5[%c0_33, %c0_34] : memref<36x256xf32, #tpu.memory_space<vmem>>, vector<4x256xf32>
    tpu.vector_store %arg5[%c0_33, %c0_34], %89 {strides = array<i32>} : memref<36x256xf32, #tpu.memory_space<vmem>>, vector<4x256xf32>,
    %c4_35 = arith.constant 4 : index
    %c0_36 = arith.constant 0 : index
    %94 = vector.load %arg5[%c4_35, %c0_36] : memref<36x256xf32, #tpu.memory_space<vmem>>, vector<4x256xf32>
    tpu.vector_store %arg5[%c4_35, %c0_36], %81 {strides = array<i32>} : memref<36x256xf32, #tpu.memory_space<vmem>>, vector<4x256xf32>,
    %c8_37 = arith.constant 8 : index
    %c0_38 = arith.constant 0 : index
    %95 = vector.load %arg5[%c8_37, %c0_38] : memref<36x256xf32, #tpu.memory_space<vmem>>, vector<4x256xf32>
    tpu.vector_store %arg5[%c8_37, %c0_38], %92 {strides = array<i32>} : memref<36x256xf32, #tpu.memory_space<vmem>>, vector<4x256xf32>,
    %c1_i32_39 = arith.constant 1 : i32
    %96 = tpu.dynamic_rotate %76 by %c1_i32_39 dim 1 : vector<4x256xf32>, i32 -> vector<4x256xf32>
    %c255_i32_40 = arith.constant 255 : i32
    %97 = tpu.dynamic_rotate %76 by %c255_i32_40 dim 1 : vector<4x256xf32>, i32 -> vector<4x256xf32>
    %98 = vector.shape_cast %12 : vector<1x256xi1> to vector<1x256xi1>
    %99 = vector.broadcast %98 : vector<1x256xi1> to vector<4x256xi1>
    %100 = arith.select %99, %97, %96 : vector<4x256xi1>, vector<4x256xf32>
    %101 = vector.shape_cast %14 : vector<1x256xi1> to vector<1x256xi1>
    %102 = vector.broadcast %101 : vector<1x256xi1> to vector<4x256xi1>
    %103 = arith.select %102, %96, %97 : vector<4x256xi1>, vector<4x256xf32>
    %c12_41 = arith.constant 12 : index
    %c0_42 = arith.constant 0 : index
    %104 = vector.load %arg5[%c12_41, %c0_42] : memref<36x256xf32, #tpu.memory_space<vmem>>, vector<4x256xf32>
    tpu.vector_store %arg5[%c12_41, %c0_42], %100 {strides = array<i32>} : memref<36x256xf32, #tpu.memory_space<vmem>>, vector<4x256xf32>,
    %c16_43 = arith.constant 16 : index
    %c0_44 = arith.constant 0 : index
    %105 = vector.load %arg5[%c16_43, %c0_44] : memref<36x256xf32, #tpu.memory_space<vmem>>, vector<4x256xf32>
    tpu.vector_store %arg5[%c16_43, %c0_44], %76 {strides = array<i32>} : memref<36x256xf32, #tpu.memory_space<vmem>>, vector<4x256xf32>,
    %c20_45 = arith.constant 20 : index
    %c0_46 = arith.constant 0 : index
    %106 = vector.load %arg5[%c20_45, %c0_46] : memref<36x256xf32, #tpu.memory_space<vmem>>, vector<4x256xf32>
    tpu.vector_store %arg5[%c20_45, %c0_46], %103 {strides = array<i32>} : memref<36x256xf32, #tpu.memory_space<vmem>>, vector<4x256xf32>,
    %c1_i32_47 = arith.constant 1 : i32
    %107 = tpu.dynamic_rotate %84 by %c1_i32_47 dim 1 : vector<4x256xf32>, i32 -> vector<4x256xf32>
    %c255_i32_48 = arith.constant 255 : i32
    %108 = tpu.dynamic_rotate %84 by %c255_i32_48 dim 1 : vector<4x256xf32>, i32 -> vector<4x256xf32>
    %109 = vector.shape_cast %12 : vector<1x256xi1> to vector<1x256xi1>
    %110 = vector.broadcast %109 : vector<1x256xi1> to vector<4x256xi1>
    %111 = arith.select %110, %108, %107 : vector<4x256xi1>, vector<4x256xf32>
    %112 = vector.shape_cast %14 : vector<1x256xi1> to vector<1x256xi1>
    %113 = vector.broadcast %112 : vector<1x256xi1> to vector<4x256xi1>
    %114 = arith.select %113, %107, %108 : vector<4x256xi1>, vector<4x256xf32>
    %c24_49 = arith.constant 24 : index
    %c0_50 = arith.constant 0 : index
    %115 = vector.load %arg5[%c24_49, %c0_50] : memref<36x256xf32, #tpu.memory_space<vmem>>, vector<4x256xf32>
    tpu.vector_store %arg5[%c24_49, %c0_50], %111 {strides = array<i32>} : memref<36x256xf32, #tpu.memory_space<vmem>>, vector<4x256xf32>,
    %c28_51 = arith.constant 28 : index
    %c0_52 = arith.constant 0 : index
    %116 = vector.load %arg5[%c28_51, %c0_52] : memref<36x256xf32, #tpu.memory_space<vmem>>, vector<4x256xf32>
    tpu.vector_store %arg5[%c28_51, %c0_52], %84 {strides = array<i32>} : memref<36x256xf32, #tpu.memory_space<vmem>>, vector<4x256xf32>,
    %c32_53 = arith.constant 32 : index
    %c0_54 = arith.constant 0 : index
    %117 = vector.load %arg5[%c32_53, %c0_54] : memref<36x256xf32, #tpu.memory_space<vmem>>, vector<4x256xf32>
    tpu.vector_store %arg5[%c32_53, %c0_54], %114 {strides = array<i32>} : memref<36x256xf32, #tpu.memory_space<vmem>>, vector<4x256xf32>,
    %c0_55 = arith.constant 0 : index
    %c0_56 = arith.constant 0 : index
    %118 = vector.load %arg3[%c0_55, %c0_56] : memref<4x36xf32, #tpu.memory_space<vmem>>, vector<4x36xf32>
    %c0_57 = arith.constant 0 : index
    %c0_58 = arith.constant 0 : index
    %119 = vector.load %arg5[%c0_57, %c0_58] : memref<36x256xf32, #tpu.memory_space<vmem>>, vector<36x256xf32>
    %cst_59 = arith.constant dense<0.000000e+00> : vector<4x256xf32>
    %120 = tpu.matmul %118, %119, %cst_59 {dimension_numbers = #tpu.dot_dimension_numbers<[1], [0], [0], [1], [0, 0, 1, 1], [], []>} : vector<4x36xf32>, vector<36x256xf32>, vector<4x256xf32> -> vector<4x256xf32>
    %cst_60 = arith.constant dense<0.000000e+00> : vector<4xf32>
    %121 = vector.multi_reduction <add>, %120, %cst_60 [1] : vector<4x256xf32> to vector<4xf32>
    %122 = vector.shape_cast %121 : vector<4xf32> to vector<4x1xf32>
    %cst_61 = arith.constant 3.906250e-03 : f32
    %123 = vector.broadcast %cst_61 : f32 to vector<4x1xf32>
    %124 = arith.mulf %122, %123 : vector<4x1xf32>
    %125 = vector.broadcast %124 : vector<4x1xf32> to vector<4x256xf32>
    %126 = arith.subf %120, %125 : vector<4x256xf32>
    %127 = arith.mulf %126, %126 : vector<4x256xf32>
    %cst_62 = arith.constant dense<0.000000e+00> : vector<4xf32>
    %128 = vector.multi_reduction <add>, %127, %cst_62 [1] : vector<4x256xf32> to vector<4xf32>
    %129 = vector.shape_cast %128 : vector<4xf32> to vector<4x1xf32>
    %cst_63 = arith.constant 3.906250e-03 : f32
    %130 = vector.broadcast %cst_63 : f32 to vector<4x1xf32>
    %131 = arith.mulf %129, %130 : vector<4x1xf32>
    %cst_64 = arith.constant 9.99999974E-6 : f32
    %132 = vector.broadcast %cst_64 : f32 to vector<4x1xf32>
    %133 = arith.addf %131, %132 : vector<4x1xf32>
    %134 = math.rsqrt %133 : vector<4x1xf32>
    %135 = vector.broadcast %134 : vector<4x1xf32> to vector<4x256xf32>
    %136 = arith.mulf %126, %135 : vector<4x256xf32>
    %137 = arith.addf %1, %136 : vector<4x256xf32>
    %c0_65 = arith.constant 0 : index
    %c0_66 = arith.constant 0 : index
    %c0_67 = arith.constant 0 : index
    %138 = vector.load %arg4[%c0_65, %c0_66, %c0_67] : memref<1x4x256xf32, #tpu.memory_space<vmem>>, vector<1x4x256xf32>
    %139 = vector.shape_cast %138 : vector<1x4x256xf32> to vector<4x256xf32>
    %140 = vector.shape_cast %137 : vector<4x256xf32> to vector<1x4x256xf32>
    tpu.vector_store %arg4[%c0_65, %c0_66, %c0_67], %140 {strides = array<i32>} : memref<1x4x256xf32, #tpu.memory_space<vmem>>, vector<1x4x256xf32>,
    return
  }
  func.func @transform_0(%arg0: i32) -> (i32, i32, i32) {
    %c0_i32 = arith.constant 0 : i32
    %c0_i32_0 = arith.constant 0 : i32
    %c0_i32_1 = arith.constant 0 : i32
    return %arg0, %c0_i32, %c0_i32_0 : i32, i32, i32
  }
  func.func @transform_1(%arg0: i32) -> (i32, i32) {
    %c0_i32 = arith.constant 0 : i32
    %c0_i32_0 = arith.constant 0 : i32
    %c0_i32_1 = arith.constant 0 : i32
    return %c0_i32, %c0_i32_0 : i32, i32
  }
  func.func @transform_2(%arg0: i32) -> (i32, i32) {
    %c0_i32 = arith.constant 0 : i32
    %c0_i32_0 = arith.constant 0 : i32
    %c0_i32_1 = arith.constant 0 : i32
    return %c0_i32, %c0_i32_0 : i32, i32
  }
  func.func @transform_3(%arg0: i32) -> (i32, i32, i32) {
    %c0_i32 = arith.constant 0 : i32
    %c0_i32_0 = arith.constant 0 : i32
    %c0_i32_1 = arith.constant 0 : i32
    return %arg0, %c0_i32, %c0_i32_0 : i32, i32, i32
  }
}

</mosaic_0001>

<llo_original>
// kernel: resnet_block_pallas.1
$region0: #{resnet_block_pallas.1}
  #allocation0 [shape = 'u32[]', space=smem, size = 0x4, offset = 0x4, fixed_abs, tag = 'smem constant byte address 0x4 - core index']
  #allocation1 [shape = 'u32[144,128]{1,0:T(1,128)}', space=vmem, size = 0x12000, scoped, tag = 'internal scratch']
  #allocation2 [shape = 'f32[36,256]{1,0:T(8,128)}', space=vmem, size = 0xa000, scoped, tag = 'scratch operand']
  %s0 = inlined_call_operand.vmem [shape: f32[2,4,256], index: 0, kind: input, shape index: {}]
  %s1 = inlined_call_operand.vmem [shape: f32[4,36], index: 1, kind: input, shape index: {}]
  %s2 = inlined_call_operand.vmem [shape: f32[4,36], index: 2, kind: input, shape index: {}]
  %s3 = inlined_call_operand.vmem [shape: f32[2,4,256], index: 3, kind: output, shape index: {}]
  %s4 = sld [smem:[#allocation0]]
  $region45: #{resnet_block_pallas.1} parent=0
    _
  %s6 = ssub.s32 1, %s4
  %s7 = scalar_select 0, %s6, %s4
  loop: start=0, step=1, limit=4
  $region2: #{resnet_block_pallas.1} parent=0 // loop_pre_header
    _
  $region3: #{resnet_block_pallas.1} parent=0 // loop_header
    %s9 = sphi 0, %s13
    %p10 = scmp.ge.s32.totalorder %s9, 4
    %s19 = sphi 0, %s21
    %s22 = sphi 0, %s19
    %s23 = sphi 0, %s22
    %s39 = sphi 0, %s23
    %s43 = sphi 0, %s43
    %s45 = sphi 0, %s43
    %s46 = sphi 0, %s45
    %s60 = sphi 0, %s46
    %s64 = sphi 0, %s64
    %s66 = sphi 0, %s64
    %s67 = sphi 0, %s66
    %s81 = sphi 0, %s67
    %s87 = sphi 0, %s89
    %s90 = sphi 0, %s87
    %s91 = sphi 0, %s90
    %s107 = sphi 0, %s91
  $region4: #{resnet_block_pallas.1} parent=0 // loop_header_branch
    %12 = sbr.rel (%p10) target = $region8
  $region5: #{resnet_block_pallas.1} parent=0 // loop_body
    %s14 = ssub.s32 %s9, 1
    %s15 = ssub.s32 %s9, 2
    %s16 = sadd.s32 %s9, 1
    %s17 = ssub.s32 %s9, %s16
    %p18 = scmp.eq.s32.totalorder %s17, 0
    %s20 = sadd.s32 %s19, 1
    %s21 = scalar_select %p18, %s19, %s20
    %p24 = pneg %p18
    %p25 = scmp.eq.s32.totalorder %s9, 1
    %p26 = por %p24, %p25
    %p27 = scmp.ne.s32.totalorder %s19, %s22
    %p28 = scmp.eq.s32.totalorder %s9, 0
    %p29 = por %p27, %p28
    %p30 = scmp.ne.s32.totalorder %s19, %s22
    %p31 = scmp.eq.s32.totalorder %s14, 1
    %p32 = por %p30, %p31
    %p33 = scmp.ne.s32.totalorder %s22, %s23
    %p34 = scmp.eq.s32.totalorder %s14, 0
    %p35 = por %p33, %p34
    %p36 = scmp.ne.s32.totalorder %s22, %s23
    %p37 = scmp.eq.s32.totalorder %s15, 1
    %p38 = por %p36, %p37
    %p40 = scmp.ne.s32.totalorder %s23, %s39
    %p41 = scmp.eq.s32.totalorder %s15, 0
    %p42 = por %p40, %p41
    %s44 = sadd.s32 %s43, 1
    %p47 = scmp.eq.s32.totalorder %s9, 1
    %p48 = scmp.ne.s32.totalorder %s43, %s45
    %p49 = scmp.eq.s32.totalorder %s9, 0
    %p50 = por %p48, %p49
    %p51 = scmp.ne.s32.totalorder %s43, %s45
    %p52 = scmp.eq.s32.totalorder %s14, 1
    %p53 = por %p51, %p52
    %p54 = scmp.ne.s32.totalorder %s45, %s46
    %p55 = scmp.eq.s32.totalorder %s14, 0
    %p56 = por %p54, %p55
    %p57 = scmp.ne.s32.totalorder %s45, %s46
    %p58 = scmp.eq.s32.totalorder %s15, 1
    %p59 = por %p57, %p58
    %p61 = scmp.ne.s32.totalorder %s46, %s60
    %p62 = scmp.eq.s32.totalorder %s15, 0
    %p63 = por %p61, %p62
    %s65 = sadd.s32 %s64, 1
    %p68 = scmp.eq.s32.totalorder %s9, 1
    %p69 = scmp.ne.s32.totalorder %s64, %s66
    %p70 = scmp.eq.s32.totalorder %s9, 0
    %p71 = por %p69, %p70
    %p72 = scmp.ne.s32.totalorder %s64, %s66
    %p73 = scmp.eq.s32.totalorder %s14, 1
    %p74 = por %p72, %p73
    %p75 = scmp.ne.s32.totalorder %s66, %s67
    %p76 = scmp.eq.s32.totalorder %s14, 0
    %p77 = por %p75, %p76
    %p78 = scmp.ne.s32.totalorder %s66, %s67
    %p79 = scmp.eq.s32.totalorder %s15, 1
    %p80 = por %p78, %p79
    %p82 = scmp.ne.s32.totalorder %s67, %s81
    %p83 = scmp.eq.s32.totalorder %s15, 0
    %p84 = por %p82, %p83
    %s85 = ssub.s32 %s9, %s16
    %p86 = scmp.eq.s32.totalorder %s85, 0
    %s88 = sadd.s32 %s87, 1
    %s89 = scalar_select %p86, %s87, %s88
    %p92 = pneg %p86
    %p93 = scmp.eq.s32.totalorder %s9, 1
    %p94 = por %p92, %p93
    %p95 = scmp.ne.s32.totalorder %s87, %s90
    %p96 = scmp.eq.s32.totalorder %s9, 0
    %p97 = por %p95, %p96
    %p98 = scmp.ne.s32.totalorder %s87, %s90
    %p99 = scmp.eq.s32.totalorder %s14, 1
    %p100 = por %p98, %p99
    %p101 = scmp.ne.s32.totalorder %s90, %s91
    %p102 = scmp.eq.s32.totalorder %s14, 0
    %p103 = por %p101, %p102
    %p104 = scmp.ne.s32.totalorder %s90, %s91
    %p105 = scmp.eq.s32.totalorder %s15, 1
    %p106 = por %p104, %p105
    %p108 = scmp.ne.s32.totalorder %s91, %s107
    %p109 = scmp.eq.s32.totalorder %s15, 0
    %p110 = por %p108, %p109
    %p111 = scmp.le.s32.totalorder 1, %s9
    %p112 = scmp.lt.s32.totalorder %s9, 3
    %p113 = pnand %p111, %p112
    %p114 = pneg %p113
    // Predicated region
    $region9: #{resnet_block_pallas.1} parent=5 // pred_check
      _
    $region10: #{resnet_block_pallas.1} parent=5 // pred_check_branch
      %116 = sbr.rel (%p113) target = $region12
    $region11: #{resnet_block_pallas.1} parent=5 // pred_region
      %s117 = ssub.s32 %s9, 1
      // Predicated region
      $region13: #{resnet_block_pallas.1} parent=11 // pred_check
        %p118 = pneg %p56
      $region14: #{resnet_block_pallas.1} parent=11 // pred_check_branch
        %120 = sbr.rel (%p118) target = $region16
      $region15: #{resnet_block_pallas.1} parent=11 // pred_region
        _
      $region16: #{resnet_block_pallas.1} parent=11 // pred_fallthru
        _
      // Predicated region
      $region17: #{resnet_block_pallas.1} parent=11 // pred_check
        %p121 = pneg %p77
      $region18: #{resnet_block_pallas.1} parent=11 // pred_check_branch
        %123 = sbr.rel (%p121) target = $region20
      $region19: #{resnet_block_pallas.1} parent=11 // pred_region
        _
      $region20: #{resnet_block_pallas.1} parent=11 // pred_fallthru
        _
    $region12: #{resnet_block_pallas.1} parent=5 // pred_fallthru
      _
    %p124 = scmp.lt.s32.totalorder %s9, 2
    // Predicated region
    $region21: #{resnet_block_pallas.1} parent=5 // pred_check
      %p125 = pneg %p124
    $region22: #{resnet_block_pallas.1} parent=5 // pred_check_branch
      %127 = sbr.rel (%p125) target = $region24
    $region23: #{resnet_block_pallas.1} parent=5 // pred_region
      // Predicated region
      $region25: #{resnet_block_pallas.1} parent=23 // pred_check
        %p128 = pneg %p29
      $region26: #{resnet_block_pallas.1} parent=23 // pred_check_branch
        %130 = sbr.rel (%p128) target = $region28
      $region27: #{resnet_block_pallas.1} parent=23 // pred_region
        %p131 = scmp.lt.s32.totalorder %s9, 1
        %s132 = scalar_select %p131, %s9, 1
        %s133 = smul.addr %s132, 2
        %s134 = smul.addr %s133, 4
        %s135 = scalar_lea.vmem %s0, %s134
      $region28: #{resnet_block_pallas.1} parent=23 // pred_fallthru
        _
    $region24: #{resnet_block_pallas.1} parent=5 // pred_fallthru
      _
    %p136 = scmp.le.s32.totalorder 1, %s9
    %p137 = scmp.lt.s32.totalorder %s9, 3
    %p138 = pnand %p136, %p137
    %p139 = pneg %p138
    // Predicated region
    $region29: #{resnet_block_pallas.1} parent=5 // pred_check
      _
    $region30: #{resnet_block_pallas.1} parent=5 // pred_check_branch
      %141 = sbr.rel (%p138) target = $region32
    $region31: #{resnet_block_pallas.1} parent=5 // pred_region
      %s142 = ssub.s32 %s9, 1
      %p143 = scmp.lt.s32.totalorder %s14, 1
      %s144 = scalar_select %p143, %s14, 1
      %s145 = smul.addr %s144, 2
      %s146 = smul.addr %s145, 4
      %s147 = scalar_lea.vmem %s0, %s146
      %p148 = pneg %p35
      %p149 = pneg %p32
      %p150 = pneg %p56
      %p151 = pneg %p53
      %p152 = pneg %p77
      %p153 = pneg %p74
      %p154 = pneg %p103
      %p155 = pneg %p100
      %p156 = scmp.lt.s32.totalorder %s14, 1
      %s157 = scalar_select %p156, %s14, 1
      %s158 = smul.addr %s157, 2
      %s159 = smul.addr %s158, 4
      %s160 = scalar_lea.vmem %s3, %s159
      %p161 = scmp.lt.s32.totalorder %s14, 1
      %s162 = scalar_select %p161, %s14, 1
      %s163 = smul.addr %s162, 2
      %s164 = smul.addr %s163, 4
      %s165 = scalar_lea.vmem %s0, %s164
      %p166 = scmp.lt.s32.totalorder %s14, 1
      %s167 = scalar_select %p166, %s14, 1
      %s168 = smul.addr %s167, 2
      %s169 = smul.addr %s168, 4
      %s170 = scalar_lea.vmem %s3, %s169
      %v171 = vld [vmem:[%s165] sm:$0xff]
      %v172 = vlaneseq
      %v173 = vand.u32 %v172, 127
      %v174 = vadd.s32 %v173, 128
      %v175 = vshra.s32 %v173, 4
      %v176 = vshra.s32 %v174, 4
      %v177 = vand.u32 %v173, 15
      %v178 = vand.u32 %v174, 15
      %vm179 = vcmp.eq.s32.totalorder %v175, 0
      %vm180 = vcmp.eq.s32.totalorder %v176, 0
      %vm181 = vcmp.eq.s32.totalorder %v175, 15
      %vm182 = vcmp.eq.s32.totalorder %v176, 15
      %vm183 = vcmp.eq.s32.totalorder %v177, 0
      %vm184 = vcmp.eq.s32.totalorder %v178, 0
      %vm185 = vcmp.eq.s32.totalorder %v177, 15
      %vm186 = vcmp.eq.s32.totalorder %v178, 15
      %v188 = vcombine.high %v171, %v171
      %190 = vrot.lane.b32.xlu0 %v171, 16
      %v191 = vpop.permute.xlu0 %190
      %192 = vrot.lane.b32.xlu0 %v188, 16
      %v193 = vpop.permute.xlu0 %192
      %vm194 = vcmp.lt.s32.totalorder %v173, 16
      %v195 = vsel %vm194, %v191, %v193
      %v196 = vsel %vm194, %v193, %v191
      %197 = vrot.lane.b32.xlu0 %v171, 112
      %v198 = vpop.permute.xlu0 %197
      %199 = vrot.lane.b32.xlu0 %v188, 112
      %v200 = vpop.permute.xlu0 %199
      %vm201 = vcmp.lt.s32.totalorder %v173, 112
      %v202 = vsel %vm201, %v198, %v200
      %v203 = vsel %vm201, %v200, %v198
      %v204 = vsel %vm179, 1, 0
      %v205 = vsel %vm180, 1, 0
      %vm206 = vcmp.eq.s32.totalorder %v204, 1
      %vm207 = vcmp.eq.s32.totalorder %v205, 1
      %v208 = vsel %vm206, %v202, %v196
      %v209 = vsel %vm207, %v203, %v195
      %v210 = vsel %vm181, 1, 0
      %v211 = vsel %vm182, 1, 0
      %vm212 = vcmp.eq.s32.totalorder %v210, 1
      %vm213 = vcmp.eq.s32.totalorder %v211, 1
      %v214 = vsel %vm212, %v196, %v202
      %v215 = vsel %vm213, %v195, %v203
      %216 = vrot.lane.b32.xlu0 %v208, 1
      %v217 = vpop.permute.xlu0 %216
      %218 = vrot.lane.b32.xlu0 %v209, 1
      %v219 = vpop.permute.xlu0 %218
      %vm220 = vcmp.lt.s32.totalorder %v173, 1
      %v221 = vsel %vm220, %v217, %v219
      %v222 = vsel %vm220, %v219, %v217
      %223 = vrot.lane.b32.xlu0 %v208, 127
      %v224 = vpop.permute.xlu0 %223
      %225 = vrot.lane.b32.xlu0 %v209, 127
      %v226 = vpop.permute.xlu0 %225
      %vm227 = vcmp.lt.s32.totalorder %v173, 127
      %v228 = vsel %vm227, %v224, %v226
      %v229 = vsel %vm227, %v226, %v224
      %v230 = vsel %vm183, 1, 0
      %v231 = vsel %vm184, 1, 0
      %vm232 = vcmp.eq.s32.totalorder %v230, 1
      %vm233 = vcmp.eq.s32.totalorder %v231, 1
      %v234 = vsel %vm232, %v228, %v222
      %v235 = vsel %vm233, %v229, %v221
      %v236 = vsel %vm185, 1, 0
      %v237 = vsel %vm186, 1, 0
      %vm238 = vcmp.eq.s32.totalorder %v236, 1
      %vm239 = vcmp.eq.s32.totalorder %v237, 1
      %v240 = vsel %vm238, %v222, %v228
      %v241 = vsel %vm239, %v221, %v229
      %242 = vst [vmem:[#allocation2] sm:$0xf] %v234
      %243 = vst [vmem:[#allocation2 + $0x8] sm:$0xf] %v235
      %v246 = vrot.slane %v208, 4
      %v247 = vrot.slane %v209, 4
      %250 = vst [vmem:[#allocation2] sm:$0xf0] %v246
      %251 = vst [vmem:[#allocation2 + $0x8] sm:$0xf0] %v247
      %252 = vst [vmem:[#allocation2 + $0x10] sm:$0xf] %v240
      %253 = vst [vmem:[#allocation2 + $0x18] sm:$0xf] %v241
      %254 = vrot.lane.b32.xlu0 %v171, 1
      %v255 = vpop.permute.xlu0 %254
      %256 = vrot.lane.b32.xlu0 %v188, 1
      %v257 = vpop.permute.xlu0 %256
      %v258 = vsel %vm220, %v255, %v257
      %v259 = vsel %vm220, %v257, %v255
      %260 = vrot.lane.b32.xlu0 %v171, 127
      %v261 = vpop.permute.xlu0 %260
      %262 = vrot.lane.b32.xlu0 %v188, 127
      %v263 = vpop.permute.xlu0 %262
      %v264 = vsel %vm227, %v261, %v263
      %v265 = vsel %vm227, %v263, %v261
      %v266 = vsel %vm232, %v264, %v259
      %v267 = vsel %vm233, %v265, %v258
      %v268 = vsel %vm238, %v259, %v264
      %v269 = vsel %vm239, %v258, %v265
      %v272 = vrot.slane %v266, 4
      %v273 = vrot.slane %v267, 4
      %276 = vst [vmem:[#allocation2 + $0x10] sm:$0xf0] %v272
      %277 = vst [vmem:[#allocation2 + $0x18] sm:$0xf0] %v273
      %278 = vst [vmem:[#allocation2 + $0x20] sm:$0xf] %v171
      %279 = vst [vmem:[#allocation2 + $0x28] sm:$0xf] %v188
      %v282 = vrot.slane %v268, 4
      %v283 = vrot.slane %v269, 4
      %286 = vst [vmem:[#allocation2 + $0x20] sm:$0xf0] %v282
      %287 = vst [vmem:[#allocation2 + $0x28] sm:$0xf0] %v283
      %288 = vrot.lane.b32.xlu0 %v214, 1
      %v289 = vpop.permute.xlu0 %288
      %290 = vrot.lane.b32.xlu0 %v215, 1
      %v291 = vpop.permute.xlu0 %290
      %v292 = vsel %vm220, %v289, %v291
      %v293 = vsel %vm220, %v291, %v289
      %294 = vrot.lane.b32.xlu0 %v214, 127
      %v295 = vpop.permute.xlu0 %294
      %296 = vrot.lane.b32.xlu0 %v215, 127
      %v297 = vpop.permute.xlu0 %296
      %v298 = vsel %vm227, %v295, %v297
      %v299 = vsel %vm227, %v297, %v295
      %v300 = vsel %vm232, %v298, %v293
      %v301 = vsel %vm233, %v299, %v292
      %v302 = vsel %vm238, %v293, %v298
      %v303 = vsel %vm239, %v292, %v299
      %304 = vst [vmem:[#allocation2 + $0x30] sm:$0xf] %v300
      %305 = vst [vmem:[#allocation2 + $0x38] sm:$0xf] %v301
      %v308 = vrot.slane %v214, 4
      %v309 = vrot.slane %v215, 4
      %312 = vst [vmem:[#allocation2 + $0x30] sm:$0xf0] %v308
      %313 = vst [vmem:[#allocation2 + $0x38] sm:$0xf0] %v309
      %314 = vst [vmem:[#allocation2 + $0x40] sm:$0xf] %v302
      %315 = vst [vmem:[#allocation2 + $0x48] sm:$0xf] %v303
      %v316 = vld [vmem:[%s1] sm:$0xf]
      %v317 = vld [vmem:[#allocation2] sm:$0xff]
      %v318 = vld [vmem:[#allocation2 + $0x8] sm:$0xff]
      %v319 = vld [vmem:[#allocation2 + $0x10] sm:$0xff]
      %v320 = vld [vmem:[#allocation2 + $0x18] sm:$0xff]
      %v321 = vld [vmem:[#allocation2 + $0x20] sm:$0xff]
      %v322 = vld [vmem:[#allocation2 + $0x28] sm:$0xff]
      %v323 = vld [vmem:[#allocation2 + $0x30] sm:$0xff]
      %v324 = vld [vmem:[#allocation2 + $0x38] sm:$0xff]
      %v325 = vld [vmem:[#allocation2 + $0x40] sm:$0xf]
      %v326 = vld [vmem:[#allocation2 + $0x48] sm:$0xf]
      %vm327 = vcmask 293888
      %v329 = vsel %vm327, %v316, 0
      %vm331 = vcmask 1043456
      %v333 = vsel %vm331, %v325, 0
      %v336 = vsel %vm331, %v326, 0
      %338 = vmatprep.subr.mxu0 %v318
      %339 = vmatpush1.msra.mxu0 %v317
      %340 = vmatprep.subr.mxu0 %v320
      %341 = vmatpush1.msra.mxu0 %v319
      %342 = vmatprep.subr.mxu0 %v322
      %343 = vmatpush1.msra.mxu0 %v321
      %344 = vmatprep.subr.mxu0 %v324
      %345 = vmatpush1.msra.mxu0 %v323
      %346 = vmatprep.subr.mxu0 %v336
      %347 = vmatpush1.msra.mxu0 %v333
      %348 = vmatprep.subr.mxu0 0.0
      %349 = vmatpush1.msra.mxu0 0.0
      %350 = vmatprep.subr.mxu0 0.0
      %351 = vmatpush1.msra.mxu0 0.0
      %352 = vmatprep.subr.mxu0 0.0
      %353 = vmatpush1.msra.mxu0 0.0
      %354 = vmatprep.subr.mxu0 0.0
      %355 = vmatpush1.msra.mxu0 0.0
      %356 = vmatprep.subr.mxu0 0.0
      %357 = vmatpush1.msra.mxu0 0.0
      %358 = vmatprep.subr.mxu0 0.0
      %359 = vmatpush1.msra.mxu0 0.0
      %360 = vmatprep.subr.mxu0 0.0
      %361 = vmatpush1.msra.mxu0 0.0
      %362 = vmatprep.subr.mxu0 0.0
      %363 = vmatpush1.msra.mxu0 0.0
      %364 = vmatprep.subr.mxu0 0.0
      %365 = vmatpush1.msra.mxu0 0.0
      %366 = vmatprep.subr.mxu0 0.0
      %367 = vmatpush1.msra.mxu0 0.0
      %368 = vmatprep.subr.mxu0 0.0
      %369 = vmatpush1.msra.mxu0 0.0
      %370 = vmatprep.subr.mxu0 0.0
      %371 = vmatpush1.msra.mxu0 0.0
      %372 = vmatprep.subr.mxu0 0.0
      %373 = vmatpush1.msra.mxu0 0.0
      %374 = vmatprep.subr.mxu0 0.0
      %375 = vmatpush1.msra.mxu0 0.0
      %376 = vmatprep.subr.mxu0 0.0
      %377 = vmatpush1.msra.mxu0 0.0
      %378 = vmatprep.subr.mxu0 0.0
      %379 = vmatpush1.msra.mxu0 0.0
      %380 = vmatprep.subr.mxu0 0.0
      %381 = vmatpush1.msra.mxu0 0.0
      %382 = vmatprep.subr.mxu0 0.0
      %383 = vmatpush1.msra.mxu0 0.0
      %384 = vmatprep.subr.mxu0 0.0
      %385 = vmatpush1.msra.mxu0 0.0
      %386 = vmatprep.subr.mxu0 0.0
      %387 = vmatpush1.msra.mxu0 0.0
      %388 = vmatprep.subr.mxu0 0.0
      %389 = vmatpush1.msra.mxu0 0.0
      %390 = vmatprep.subr.mxu0 0.0
      %391 = vmatpush1.msra.mxu0 0.0
      %392 = vmatprep.subr.mxu0 0.0
      %393 = vmatpush1.msra.mxu0 0.0
      %394 = vmatprep.subr.mxu0 0.0
      %395 = vmatpush1.msra.mxu0 0.0
      %396 = vmatprep.subr.mxu0 0.0
      %397 = vmatpush1.msra.mxu0 0.0
      %398 = vmatprep.subr.mxu0 0.0
      %399 = vmatpush1.msra.mxu0 0.0
      %400 = vmatprep.subr.mxu0 0.0
      %401 = vmatpush1.msra.mxu0 0.0
      %402 = vmatprep.mubr.f32.mxu0 0.0
      %403 = vmatmul.mubr.f32.gmra.mrb[0].mxu0 %v329
      %v404 = vpop.f32.mrb[0].mxu0
      %v405 = vadd.f32 0.0, %v404
      %v406 = vpop.f32.mrb[0].mxu0
      %v407 = vadd.f32 0.0, %v406
      %408 = vdwg.mxu0
      %v409 = vsel %vm331, %v405, 0.0
      %v410 = vsel %vm331, %v407, 0.0
      %v411 = vadd.f32 %v409, %v410
      %412 = vadd.xlane.f32.xlu0 %v411
      %v413 = vpop.xlane.xlu0 %412
      %v414 = vmul.f32 %v413, 0.00390625
      %v415 = vsub.f32 %v405, %v414
      %v416 = vsub.f32 %v407, %v414
      %v417 = vmul.f32 %v415, %v415
      %v418 = vmul.f32 %v416, %v416
      %v419 = vsel %vm331, %v417, 0.0
      %v420 = vsel %vm331, %v418, 0.0
      %v421 = vadd.f32 %v419, %v420
      %422 = vadd.xlane.f32.xlu0 %v421
      %v423 = vpop.xlane.xlu0 %422
      %v424 = vmul.f32 %v423, 0.00390625
      %v425 = vadd.f32 %v424, 1e-05
      %v426 = vrsqrt.pop %v425
      %v427 = vmul.f32 %v415, %v426
      %v428 = vmul.f32 %v416, %v426
      %v429 = vmax.f32 %v427, 0.0
      %v430 = vmax.f32 %v428, 0.0
      %431 = vrot.lane.b32.xlu0 %v429, 16
      %v432 = vpop.permute.xlu0 %431
      %433 = vrot.lane.b32.xlu0 %v430, 16
      %v434 = vpop.permute.xlu0 %433
      %v435 = vsel %vm194, %v432, %v434
      %v436 = vsel %vm194, %v434, %v432
      %437 = vrot.lane.b32.xlu0 %v429, 112
      %v438 = vpop.permute.xlu0 %437
      %439 = vrot.lane.b32.xlu0 %v430, 112
      %v440 = vpop.permute.xlu0 %439
      %v441 = vsel %vm201, %v438, %v440
      %v442 = vsel %vm201, %v440, %v438
      %v443 = vsel %vm206, %v441, %v436
      %v444 = vsel %vm207, %v442, %v435
      %v445 = vsel %vm212, %v436, %v441
      %v446 = vsel %vm213, %v435, %v442
      %447 = vrot.lane.b32.xlu0 %v443, 1
      %v448 = vpop.permute.xlu0 %447
      %449 = vrot.lane.b32.xlu0 %v444, 1
      %v450 = vpop.permute.xlu0 %449
      %v451 = vsel %vm220, %v448, %v450
      %v452 = vsel %vm220, %v450, %v448
      %453 = vrot.lane.b32.xlu0 %v443, 127
      %v454 = vpop.permute.xlu0 %453
      %455 = vrot.lane.b32.xlu0 %v444, 127
      %v456 = vpop.permute.xlu0 %455
      %v457 = vsel %vm227, %v454, %v456
      %v458 = vsel %vm227, %v456, %v454
      %v459 = vsel %vm232, %v457, %v452
      %v460 = vsel %vm233, %v458, %v451
      %v461 = vsel %vm238, %v452, %v457
      %v462 = vsel %vm239, %v451, %v458
      %463 = vst [vmem:[#allocation2] sm:$0xf] %v459
      %464 = vst [vmem:[#allocation2 + $0x8] sm:$0xf] %v460
      %v467 = vrot.slane %v443, 4
      %v468 = vrot.slane %v444, 4
      %471 = vst [vmem:[#allocation2] sm:$0xf0] %v467
      %472 = vst [vmem:[#allocation2 + $0x8] sm:$0xf0] %v468
      %473 = vst [vmem:[#allocation2 + $0x10] sm:$0xf] %v461
      %474 = vst [vmem:[#allocation2 + $0x18] sm:$0xf] %v462
      %475 = vrot.lane.b32.xlu0 %v429, 1
      %v476 = vpop.permute.xlu0 %475
      %477 = vrot.lane.b32.xlu0 %v430, 1
      %v478 = vpop.permute.xlu0 %477
      %v479 = vsel %vm220, %v476, %v478
      %v480 = vsel %vm220, %v478, %v476
      %481 = vrot.lane.b32.xlu0 %v429, 127
      %v482 = vpop.permute.xlu0 %481
      %483 = vrot.lane.b32.xlu0 %v430, 127
      %v484 = vpop.permute.xlu0 %483
      %v485 = vsel %vm227, %v482, %v484
      %v486 = vsel %vm227, %v484, %v482
      %v487 = vsel %vm232, %v485, %v480
      %v488 = vsel %vm233, %v486, %v479
      %v489 = vsel %vm238, %v480, %v485
      %v490 = vsel %vm239, %v479, %v486
      %v493 = vrot.slane %v487, 4
      %v494 = vrot.slane %v488, 4
      %497 = vst [vmem:[#allocation2 + $0x10] sm:$0xf0] %v493
      %498 = vst [vmem:[#allocation2 + $0x18] sm:$0xf0] %v494
      %499 = vst [vmem:[#allocation2 + $0x20] sm:$0xf] %v429
      %500 = vst [vmem:[#allocation2 + $0x28] sm:$0xf] %v430
      %v503 = vrot.slane %v489, 4
      %v504 = vrot.slane %v490, 4
      %507 = vst [vmem:[#allocation2 + $0x20] sm:$0xf0] %v503
      %508 = vst [vmem:[#allocation2 + $0x28] sm:$0xf0] %v504
      %509 = vrot.lane.b32.xlu0 %v445, 1
      %v510 = vpop.permute.xlu0 %509
      %511 = vrot.lane.b32.xlu0 %v446, 1
      %v512 = vpop.permute.xlu0 %511
      %v513 = vsel %vm220, %v510, %v512
      %v514 = vsel %vm220, %v512, %v510
      %515 = vrot.lane.b32.xlu0 %v445, 127
      %v516 = vpop.permute.xlu0 %515
      %517 = vrot.lane.b32.xlu0 %v446, 127
      %v518 = vpop.permute.xlu0 %517
      %v519 = vsel %vm227, %v516, %v518
      %v520 = vsel %vm227, %v518, %v516
      %v521 = vsel %vm232, %v519, %v514
      %v522 = vsel %vm233, %v520, %v513
      %v523 = vsel %vm238, %v514, %v519
      %v524 = vsel %vm239, %v513, %v520
      %525 = vst [vmem:[#allocation2 + $0x30] sm:$0xf] %v521
      %526 = vst [vmem:[#allocation2 + $0x38] sm:$0xf] %v522
      %v529 = vrot.slane %v445, 4
      %v530 = vrot.slane %v446, 4
      %533 = vst [vmem:[#allocation2 + $0x30] sm:$0xf0] %v529
      %534 = vst [vmem:[#allocation2 + $0x38] sm:$0xf0] %v530
      %535 = vst [vmem:[#allocation2 + $0x40] sm:$0xf] %v523
      %536 = vst [vmem:[#allocation2 + $0x48] sm:$0xf] %v524
      %v537 = vld [vmem:[%s2] sm:$0xf]
      %v538 = vld [vmem:[#allocation2] sm:$0xff]
      %v539 = vld [vmem:[#allocation2 + $0x8] sm:$0xff]
      %v540 = vld [vmem:[#allocation2 + $0x10] sm:$0xff]
      %v541 = vld [vmem:[#allocation2 + $0x18] sm:$0xff]
      %v542 = vld [vmem:[#allocation2 + $0x20] sm:$0xff]
      %v543 = vld [vmem:[#allocation2 + $0x28] sm:$0xff]
      %v544 = vld [vmem:[#allocation2 + $0x30] sm:$0xff]
      %v545 = vld [vmem:[#allocation2 + $0x38] sm:$0xff]
      %v546 = vld [vmem:[#allocation2 + $0x40] sm:$0xf]
      %v547 = vld [vmem:[#allocation2 + $0x48] sm:$0xf]
      %v549 = vsel %vm327, %v537, 0
      %v552 = vsel %vm331, %v546, 0
      %v555 = vsel %vm331, %v547, 0
      %557 = vmatprep.subr.mxu0 %v539
      %558 = vmatpush1.msra.mxu0 %v538
      %559 = vmatprep.subr.mxu0 %v541
      %560 = vmatpush1.msra.mxu0 %v540
      %561 = vmatprep.subr.mxu0 %v543
      %562 = vmatpush1.msra.mxu0 %v542
      %563 = vmatprep.subr.mxu0 %v545
      %564 = vmatpush1.msra.mxu0 %v544
      %565 = vmatprep.subr.mxu0 %v555
      %566 = vmatpush1.msra.mxu0 %v552
      %567 = vmatprep.subr.mxu0 0.0
      %568 = vmatpush1.msra.mxu0 0.0
      %569 = vmatprep.subr.mxu0 0.0
      %570 = vmatpush1.msra.mxu0 0.0
      %571 = vmatprep.subr.mxu0 0.0
      %572 = vmatpush1.msra.mxu0 0.0
      %573 = vmatprep.subr.mxu0 0.0
      %574 = vmatpush1.msra.mxu0 0.0
      %575 = vmatprep.subr.mxu0 0.0
      %576 = vmatpush1.msra.mxu0 0.0
      %577 = vmatprep.subr.mxu0 0.0
      %578 = vmatpush1.msra.mxu0 0.0
      %579 = vmatprep.subr.mxu0 0.0
      %580 = vmatpush1.msra.mxu0 0.0
      %581 = vmatprep.subr.mxu0 0.0
      %582 = vmatpush1.msra.mxu0 0.0
      %583 = vmatprep.subr.mxu0 0.0
      %584 = vmatpush1.msra.mxu0 0.0
      %585 = vmatprep.subr.mxu0 0.0
      %586 = vmatpush1.msra.mxu0 0.0
      %587 = vmatprep.subr.mxu0 0.0
      %588 = vmatpush1.msra.mxu0 0.0
      %589 = vmatprep.subr.mxu0 0.0
      %590 = vmatpush1.msra.mxu0 0.0
      %591 = vmatprep.subr.mxu0 0.0
      %592 = vmatpush1.msra.mxu0 0.0
      %593 = vmatprep.subr.mxu0 0.0
      %594 = vmatpush1.msra.mxu0 0.0
      %595 = vmatprep.subr.mxu0 0.0
      %596 = vmatpush1.msra.mxu0 0.0
      %597 = vmatprep.subr.mxu0 0.0
      %598 = vmatpush1.msra.mxu0 0.0
      %599 = vmatprep.subr.mxu0 0.0
      %600 = vmatpush1.msra.mxu0 0.0
      %601 = vmatprep.subr.mxu0 0.0
      %602 = vmatpush1.msra.mxu0 0.0
      %603 = vmatprep.subr.mxu0 0.0
      %604 = vmatpush1.msra.mxu0 0.0
      %605 = vmatprep.subr.mxu0 0.0
      %606 = vmatpush1.msra.mxu0 0.0
      %607 = vmatprep.subr.mxu0 0.0
      %608 = vmatpush1.msra.mxu0 0.0
      %609 = vmatprep.subr.mxu0 0.0
      %610 = vmatpush1.msra.mxu0 0.0
      %611 = vmatprep.subr.mxu0 0.0
      %612 = vmatpush1.msra.mxu0 0.0
      %613 = vmatprep.subr.mxu0 0.0
      %614 = vmatpush1.msra.mxu0 0.0
      %615 = vmatprep.subr.mxu0 0.0
      %616 = vmatpush1.msra.mxu0 0.0
      %617 = vmatprep.subr.mxu0 0.0
      %618 = vmatpush1.msra.mxu0 0.0
      %619 = vmatprep.subr.mxu0 0.0
      %620 = vmatpush1.msra.mxu0 0.0
      %621 = vmatprep.mubr.f32.mxu0 0.0
      %622 = vmatmul.mubr.f32.gmra.mrb[0].mxu0 %v549
      %v623 = vpop.f32.mrb[0].mxu0
      %v624 = vadd.f32 0.0, %v623
      %v625 = vpop.f32.mrb[0].mxu0
      %v626 = vadd.f32 0.0, %v625
      %627 = vdwg.mxu0
      %v628 = vsel %vm331, %v624, 0.0
      %v629 = vsel %vm331, %v626, 0.0
      %v630 = vadd.f32 %v628, %v629
      %631 = vadd.xlane.f32.xlu0 %v630
      %v632 = vpop.xlane.xlu0 %631
      %v633 = vmul.f32 %v632, 0.00390625
      %v634 = vsub.f32 %v624, %v633
      %v635 = vsub.f32 %v626, %v633
      %v636 = vmul.f32 %v634, %v634
      %v637 = vmul.f32 %v635, %v635
      %v638 = vsel %vm331, %v636, 0.0
      %v639 = vsel %vm331, %v637, 0.0
      %v640 = vadd.f32 %v638, %v639
      %641 = vadd.xlane.f32.xlu0 %v640
      %v642 = vpop.xlane.xlu0 %641
      %v643 = vmul.f32 %v642, 0.00390625
      %v644 = vadd.f32 %v643, 1e-05
      %v645 = vrsqrt.pop %v644
      %v646 = vmul.f32 %v634, %v645
      %v647 = vmul.f32 %v635, %v645
      %v650 = vcombine.low %v646, %v647
      %v652 = vadd.f32 %v171, %v650
      %653 = vst [vmem:[%s170] sm:$0xff] %v652
      %p654 = scmp.lt.s32.totalorder %s14, 1
      %s655 = scalar_select %p654, %s14, 1
      %s656 = smul.addr %s655, 2
      %s657 = smul.addr %s656, 4
      %s658 = scalar_lea.vmem %s3, %s657
      // Predicated region
      $region33: #{resnet_block_pallas.1} parent=31 // pred_check
        %p659 = pneg %p100
      $region34: #{resnet_block_pallas.1} parent=31 // pred_check_branch
        %661 = sbr.rel (%p659) target = $region36
      $region35: #{resnet_block_pallas.1} parent=31 // pred_region
        _
      $region36: #{resnet_block_pallas.1} parent=31 // pred_fallthru
        _
    $region32: #{resnet_block_pallas.1} parent=5 // pred_fallthru
      _
    %p662 = scmp.le.s32.totalorder 2, %s9
    // Predicated region
    $region37: #{resnet_block_pallas.1} parent=5 // pred_check
      %p663 = pneg %p662
    $region38: #{resnet_block_pallas.1} parent=5 // pred_check_branch
      %665 = sbr.rel (%p663) target = $region40
    $region39: #{resnet_block_pallas.1} parent=5 // pred_region
      %s666 = ssub.s32 %s9, 2
      // Predicated region
      $region41: #{resnet_block_pallas.1} parent=39 // pred_check
        %p667 = pneg %p106
      $region42: #{resnet_block_pallas.1} parent=39 // pred_check_branch
        %669 = sbr.rel (%p667) target = $region44
      $region43: #{resnet_block_pallas.1} parent=39 // pred_region
        %p670 = scmp.lt.s32.totalorder %s15, 1
        %s671 = scalar_select %p670, %s15, 1
        %s672 = smul.addr %s671, 2
        %s673 = smul.addr %s672, 4
        %s674 = scalar_lea.vmem %s3, %s673
      $region44: #{resnet_block_pallas.1} parent=39 // pred_fallthru
        _
    $region40: #{resnet_block_pallas.1} parent=5 // pred_fallthru
      _
  $region6: #{resnet_block_pallas.1} parent=0 // loop_footer
    %s13 = sadd.s32 1, %s9
  $region7: #{resnet_block_pallas.1} parent=0 // loop_footer_branch
    %8 = sbr.rel target = $region3
  $region8: #{resnet_block_pallas.1} parent=0 // loop_exit
    _

</llo_original>
